<compile_context>
chip_gen: v7x
topology: tpu7x:2x2x1
jax: 0.10.0
libtpu: 0.0.40
codegen_flags: <defaults>
</compile_context>

<pallas_src>
import functools
import numpy as np
import jax
import jax.numpy as jnp
from jax import lax
from jax.experimental import pallas as pl
from jax.experimental.pallas import tpu as pltpu

_LANE = 128


def _round_up(x, m):
    return ((x + m - 1) // m) * m


def _tpu_defaults():
    """(vmem_limit_bytes, matmul M-tile) per TPU generation."""
    vmem_cap = None
    try:
        vmem_cap = pltpu.get_tpu_info().vmem_capacity_bytes
    except Exception:
        vmem_cap = None
    if vmem_cap is None:
        vmem_cap = 64 * 1024 * 1024            # conservative: v7x physical VMEM
    if vmem_cap >= 100 * 1024 * 1024:          # v5e / v6e: 128 MiB VMEM
        return min(int(vmem_cap * 0.85), 112 * 1024 * 1024), 512
    return 48 * 1024 * 1024, 256               # v7x: 64 MiB physical VMEM


_VMEM_LIMIT, _TM = _tpu_defaults()
_TN, _TK = 256, 256                            # only for the K-tiled fallback
_SINGLE_K_WEIGHT_BYTES = 8 * 1024 * 1024       # all ResNet-50 weights <= 4 MB bf16


def _mosaic_params(*sems):
    return pltpu.CompilerParams(
        dimension_semantics=sems if sems else None,
        vmem_limit_bytes=_VMEM_LIMIT)


def _pad2d(x, rows, cols):
    r, c = x.shape
    if r == rows and c == cols:
        return x
    return jnp.pad(x, ((0, rows - r), (0, cols - c)))


def _pick_tm(m, target):
    """Largest M-tile <= target dividing round_up(M, 8): avoids pad/slice glue."""
    m8 = _round_up(max(m, 1), 8)
    if m8 <= target:
        return m8
    t = target
    while 4 * t >= target:
        if m8 % t == 0:
            return t
        t -= 8
    return target          # accept a small pad rather than tiny tiles


# ----------------------------------------------------------------------------
# Kernel 1: matmul + fused bias (+ residual) (+ ReLU) epilogue
#   - single-K path (whole weight resident in VMEM, 1-D M grid)
#   - K-tiled fallback with f32 VMEM accumulator (kept for generality)
# ----------------------------------------------------------------------------
def _mm1_kernel(a_ref, b_ref, bias_ref, o_ref, *, relu):
    out = jnp.dot(a_ref[...], b_ref[...],
                  preferred_element_type=jnp.float32) + bias_ref[...]
    if relu:
        out = jnp.maximum(out, 0.0)
    o_ref[...] = out.astype(o_ref.dtype)


def _mm1_res_kernel(a_ref, b_ref, bias_ref, res_ref, o_ref):
    out = (jnp.dot(a_ref[...], b_ref[...], preferred_element_type=jnp.float32)
           + bias_ref[...] + res_ref[...].astype(jnp.float32))
    o_ref[...] = jnp.maximum(out, 0.0).astype(o_ref.dtype)


def _mm_kernel(a_ref, b_ref, bias_ref, o_ref, acc_ref, *, relu):
    @pl.when(pl.program_id(2) == 0)
    def _():
        acc_ref[...] = jnp.zeros_like(acc_ref)

    acc_ref[...] += jnp.dot(a_ref[...], b_ref[...],
                            preferred_element_type=jnp.float32)

    @pl.when(pl.program_id(2) == pl.num_programs(2) - 1)
    def _():
        out = acc_ref[...] + bias_ref[...]
        if relu:
            out = jnp.maximum(out, 0.0)
        o_ref[...] = out.astype(o_ref.dtype)


def _mm_res_kernel(a_ref, b_ref, bias_ref, res_ref, o_ref, acc_ref):
    @pl.when(pl.program_id(2) == 0)
    def _():
        acc_ref[...] = jnp.zeros_like(acc_ref)

    acc_ref[...] += jnp.dot(a_ref[...], b_ref[...],
                            preferred_element_type=jnp.float32)

    @pl.when(pl.program_id(2) == pl.num_programs(2) - 1)
    def _():
        out = acc_ref[...] + bias_ref[...] + res_ref[...].astype(jnp.float32)
        o_ref[...] = jnp.maximum(out, 0.0).astype(o_ref.dtype)


def pallas_matmul_fused(a, b, bias, residual=None, relu=False,
                        out_dtype=jnp.bfloat16):
    M, K = a.shape
    K2, N = b.shape
    assert K == K2
    Kp, Np = _round_up(K, _LANE), _round_up(N, _LANE)
    tm = _pick_tm(M, _TM)
    Mp = _round_up(M, tm)
    a_p = _pad2d(a.astype(jnp.bfloat16), Mp, Kp)
    bias_p = _pad2d(bias.reshape(1, N).astype(jnp.float32), 1, Np)

    if Kp * Np * 2 <= _SINGLE_K_WEIGHT_BYTES:
        # Whole weight resident in VMEM -> no K loop, no accumulator scratch.
        b_p = _pad2d(b.astype(jnp.bfloat16), Kp, Np)
        in_specs = [pl.BlockSpec((tm, Kp), lambda i: (i, 0)),
                    pl.BlockSpec((Kp, Np), lambda i: (0, 0)),
                    pl.BlockSpec((1, Np), lambda i: (0, 0))]
        args = [a_p, b_p, bias_p]
        if residual is not None:
            in_specs.append(pl.BlockSpec((tm, Np), lambda i: (i, 0)))
            args.append(_pad2d(residual.astype(jnp.bfloat16), Mp, Np))
            kernel = _mm1_res_kernel
        else:
            kernel = functools.partial(_mm1_kernel, relu=relu)
        out = pl.pallas_call(
            kernel,
            grid=(Mp // tm,),
            in_specs=in_specs,
            out_specs=pl.BlockSpec((tm, Np), lambda i: (i, 0)),
            out_shape=jax.ShapeDtypeStruct((Mp, Np), out_dtype),
            compiler_params=_mosaic_params("parallel"),
        )(*args)
    else:
        # K-tiled fallback (not hit by ResNet-50 shapes).
        tn, tk = min(_TN, Np), min(_TK, Kp)
        Np2, Kp2 = _round_up(Np, tn), _round_up(Kp, tk)
        a_p = _pad2d(a_p, Mp, Kp2)
        b_p = _pad2d(b.astype(jnp.bfloat16), Kp2, Np2)
        bias_p = _pad2d(bias_p, 1, Np2)
        in_specs = [pl.BlockSpec((tm, tk), lambda i, j, k: (i, k)),
                    pl.BlockSpec((tk, tn), lambda i, j, k: (k, j)),
                    pl.BlockSpec((1, tn), lambda i, j, k: (0, j))]
        args = [a_p, b_p, bias_p]
        if residual is not None:
            in_specs.append(pl.BlockSpec((tm, tn), lambda i, j, k: (i, j)))
            args.append(_pad2d(residual.astype(jnp.bfloat16), Mp, Np2))
            kernel = _mm_res_kernel
        else:
            kernel = functools.partial(_mm_kernel, relu=relu)
        out = pl.pallas_call(
            kernel,
            grid=(Mp // tm, Np2 // tn, Kp2 // tk),
            in_specs=in_specs,
            out_specs=pl.BlockSpec((tm, tn), lambda i, j, k: (i, j)),
            out_shape=jax.ShapeDtypeStruct((Mp, Np2), out_dtype),
            scratch_shapes=[pltpu.VMEM((tm, tn), jnp.float32)],
            compiler_params=_mosaic_params("parallel", "parallel", "arbitrary"),
        )(*args)

    if out.shape == (M, N):
        return out
    return out[:M, :N]


# ----------------------------------------------------------------------------
# Kernel 2: direct 3x3 conv (+folded BN + ReLU), parity-decomposed activation
# resident in VMEM, W tap offsets via pltpu.roll (no per-tap sublane relayout)
# ----------------------------------------------------------------------------
def _conv_kxk_kernel(x_ref, w_ref, bias_ref, o_ref, acc_ref,
                     *, kh, kw, stride, oh, ow, use_roll):
    # x_ref   : (s*s, HPq, WQ, Cp)  parity-decomposed, zero-padded activation
    # w_ref   : (kh*kw, Cp, OCp)    folded conv+BN weights (one tap per row)
    # bias_ref: (1, OCp)
    # o_ref   : (1, oh*ow, OCp)
    # acc_ref : VMEM f32 (oh*WQ, OCp) if use_roll else (oh*ow, OCp)
    wq, cp = x_ref.shape[2], x_ref.shape[3]
    ocp = o_ref.shape[-1]
    first = True
    for ki in range(kh):
        for kj in range(kw):
            pidx = (ki % stride) * stride + (kj % stride)
            a0, b0 = ki // stride, kj // stride
            if use_roll:
                # H offset: static slice above the sublane dim (free).
                # W offset: one XLU roll of the flattened (rows, C) view; the
                # wrapped / zero-padded columns land only in output columns
                # >= ow, which are dropped below.
                tap = x_ref[pidx, a0:a0 + oh, :, :].reshape(oh * wq, cp)
                if b0:
                    tap = pltpu.roll(tap, shift=oh * wq - b0, axis=0)
            else:
                tap = x_ref[pidx, a0:a0 + oh, b0:b0 + ow, :].reshape(oh * ow, cp)
            part = jnp.dot(tap, w_ref[ki * kw + kj],
                           preferred_element_type=jnp.float32)
            # Explicit VMEM scratch accumulation bounds live ranges per tap.
            if first:
                acc_ref[...] = part
                first = False
            else:
                acc_ref[...] += part
    out = jnp.maximum(acc_ref[...] + bias_ref[...], 0.0)
    if use_roll:
        out = out.reshape(oh, wq, ocp)[:, :ow, :].reshape(oh * ow, ocp)
    o_ref[0] = out.astype(o_ref.dtype)


def _parity_layout(x, pad, stride, wq):
    """Zero-pad NHWC and split H/W into stride parities: (B*s*s, HP/s, wq, C)."""
    B, H, W, C = x.shape
    HP = _round_up(H + 2 * pad, stride)
    WP = wq * stride
    xp = jnp.pad(x, ((0, 0), (pad, HP - H - pad), (pad, WP - W - pad), (0, 0)))
    x6 = xp.reshape(B, HP // stride, stride, wq, stride, C)
    xpar = jnp.transpose(x6, (0, 2, 4, 1, 3, 5))
    return xpar.reshape(B * stride * stride, HP // stride, wq, C)


def _roll_ok(w_nat):
    w_pad = _round_up(w_nat, 8)
    # Roll path needs the parity-plane width padded to a multiple of 8; use it
    # when the extra width (extra MXU rows) is cheap, otherwise slice taps.
    return (w_pad - w_nat) <= 6 or w_pad * 4 <= w_nat * 5


def direct_conv_bn_relu(p, x):
    kh, kw, s = p["kh"], p["kw"], p["stride"]
    pad = (kh - 1) // 2
    B, H, W, _ = x.shape
    oh = (H + 2 * pad - kh) // s + 1
    ow = (W + 2 * pad - kw) // s + 1
    w_nat = _round_up(W + 2 * pad, s) // s
    use_roll = _roll_ok(w_nat)
    wq = _round_up(w_nat, 8) if use_roll else w_nat
    xpar = _parity_layout(x.astype(jnp.bfloat16), pad, s, wq)
    _, hpq, _, cp = xpar.shape
    ocp = p["w"].shape[-1]
    acc_rows = oh * wq if use_roll else oh * ow
    out = pl.pallas_call(
        functools.partial(_conv_kxk_kernel, kh=kh, kw=kw, stride=s,
                          oh=oh, ow=ow, use_roll=use_roll),
        grid=(B,),
        in_specs=[
            pl.BlockSpec((s * s, hpq, wq, cp), lambda b: (b, 0, 0, 0)),
            pl.BlockSpec((kh * kw, cp, ocp), lambda b: (0, 0, 0)),
            pl.BlockSpec((1, ocp), lambda b: (0, 0)),
        ],
        out_specs=pl.BlockSpec((1, oh * ow, ocp), lambda b: (b, 0, 0)),
        out_shape=jax.ShapeDtypeStruct((B, oh * ow, ocp), jnp.bfloat16),
        scratch_shapes=[pltpu.VMEM((acc_rows, ocp), jnp.float32)],
        compiler_params=_mosaic_params("parallel"),
    )(xpar, p["w"], p["bias"].reshape(1, ocp))
    return out.reshape(B, oh, ow, ocp)


# ----------------------------------------------------------------------------
# Kernel 3: 3x3 / stride-2 maxpool (same parity + roll structure)
# ----------------------------------------------------------------------------
def _maxpool_kernel(x_ref, o_ref, *, oh, ow, use_roll):
    # Input is post-ReLU (>= 0), so zero spatial padding is equivalent to -inf.
    wq, c = x_ref.shape[2], x_ref.shape[3]
    m = None
    for ki in range(3):
        for kj in range(3):
            pidx = (ki % 2) * 2 + (kj % 2)
            a0, b0 = ki // 2, kj // 2
            if use_roll:
                tap = x_ref[pidx, a0:a0 + oh, :, :].reshape(oh * wq, c)
                if b0:
                    tap = pltpu.roll(tap, shift=oh * wq - b0, axis=0)
            else:
                tap = x_ref[pidx, a0:a0 + oh, b0:b0 + ow, :].reshape(oh * ow, c)
            m = tap if m is None else jnp.maximum(m, tap)
    if use_roll:
        m = m.reshape(oh, wq, c)[:, :ow, :].reshape(oh * ow, c)
    o_ref[0] = m


def maxpool_3x3_s2(x):
    B, H, W, C = x.shape
    oh = (H + 2 - 3) // 2 + 1
    ow = (W + 2 - 3) // 2 + 1
    w_nat = _round_up(W + 2, 2) // 2
    use_roll = _roll_ok(w_nat)
    wq = _round_up(w_nat, 8) if use_roll else w_nat
    xpar = _parity_layout(x, 1, 2, wq)
    _, hpq, _, cp = xpar.shape
    out = pl.pallas_call(
        functools.partial(_maxpool_kernel, oh=oh, ow=ow, use_roll=use_roll),
        grid=(B,),
        in_specs=[pl.BlockSpec((4, hpq, wq, cp), lambda b: (b, 0, 0, 0))],
        out_specs=pl.BlockSpec((1, oh * ow, cp), lambda b: (b, 0, 0)),
        out_shape=jax.ShapeDtypeStruct((B, oh * ow, cp), jnp.bfloat16),
        compiler_params=_mosaic_params("parallel"),
    )(xpar)
    return out.reshape(B, oh, ow, cp)


# ----------------------------------------------------------------------------
# Kernel 4: AdaptiveAvgPool2d(1) fused with fc(2048 -> 512), tiled over batch
# ----------------------------------------------------------------------------
def _pool_fc_kernel(x_ref, w_ref, bias_ref, o_ref, *, inv_hw):
    # Sum-then-scale with f32 accumulation; no whole-batch f32 temp.
    pooled = jnp.sum(x_ref[...], axis=1, dtype=jnp.float32) * inv_hw   # (tb, C)
    emb = jnp.dot(pooled.astype(jnp.bfloat16), w_ref[...],
                  preferred_element_type=jnp.float32) + bias_ref[...]
    o_ref[...] = emb


def pallas_pool_fc(x_bhw_c, w, bias):
    B, HW, C = x_bhw_c.shape
    N = w.shape[1]
    tb = min(8, _round_up(B, 8))
    Bp = _round_up(B, tb)
    xp = x_bhw_c if Bp == B else jnp.pad(x_bhw_c, ((0, Bp - B), (0, 0), (0, 0)))
    out = pl.pallas_call(
        functools.partial(_pool_fc_kernel, inv_hw=1.0 / HW),
        grid=(Bp // tb,),
        in_specs=[pl.BlockSpec((tb, HW, C), lambda i: (i, 0, 0)),
                  pl.BlockSpec((C, N), lambda i: (0, 0)),
                  pl.BlockSpec((1, N), lambda i: (0, 0))],
        out_specs=pl.BlockSpec((tb, N), lambda i: (i, 0)),
        out_shape=jax.ShapeDtypeStruct((Bp, N), jnp.float32),
        compiler_params=_mosaic_params("parallel"),
    )(xp, w.astype(jnp.bfloat16), bias.reshape(1, N).astype(jnp.float32))
    return out if Bp == B else out[:B]


# ----------------------------------------------------------------------------
# Kernel 5: L2-normalize embedding + cosine layer (rsqrt on EUP)
# ----------------------------------------------------------------------------
def _embed_head_kernel(x_ref, w_ref, feat_ref, norm_ref, logit_ref):
    x = x_ref[...]
    ssq = jnp.sum(x * x, axis=1, keepdims=True)
    inv = lax.rsqrt(ssq)                 # no eps, matching torch.div(x, norm)
    feats = x * inv
    norm_ref[...] = ssq * inv            # == ||x||_2
    feat_ref[...] = feats
    # Dropout(p=0.4) is identity in eval; cosine_layer = Linear(512, 1, bias=False)
    logit_ref[...] = jnp.dot(feats, w_ref[...], preferred_element_type=jnp.float32)


def pallas_embed_head(x, w_cos):
    B, D = x.shape
    return pl.pallas_call(
        _embed_head_kernel,
        grid=(1,),
        in_specs=[pl.BlockSpec((B, D), lambda i: (0, 0)),
                  pl.BlockSpec((D, 1), lambda i: (0, 0))],
        out_specs=[pl.BlockSpec((B, D), lambda i: (0, 0)),
                   pl.BlockSpec((B, 1), lambda i: (0, 0)),
                   pl.BlockSpec((B, 1), lambda i: (0, 0))],
        out_shape=(jax.ShapeDtypeStruct((B, D), jnp.float32),
                   jax.ShapeDtypeStruct((B, 1), jnp.float32),
                   jax.ShapeDtypeStruct((B, 1), jnp.float32)),
        compiler_params=_mosaic_params(),
    )(x, w_cos)


# ----------------------------------------------------------------------------
# Deterministic parameter init (BatchNorm folded into conv scale + bias,
# channel dims zero-padded to multiples of 128)
# ----------------------------------------------------------------------------
def _fold_bn(key, oc, ic, kh, kw):
    kw_, kg, kb, km, kv = jax.random.split(key, 5)
    fan_in = ic * kh * kw
    w = jax.random.normal(kw_, (oc, ic, kh, kw), jnp.float32) / np.sqrt(fan_in)
    gamma = 1.0 + 0.1 * jax.random.normal(kg, (oc,), jnp.float32)
    beta = 0.1 * jax.random.normal(kb, (oc,), jnp.float32)
    mean = 0.1 * jax.random.normal(km, (oc,), jnp.float32)
    var = 1.0 + 0.1 * jax.random.uniform(kv, (oc,), jnp.float32)
    scale = gamma / jnp.sqrt(var + 1e-5)
    return w * scale[:, None, None, None], beta - mean * scale


def _conv1x1_bn_init(key, oc, ic, stride):
    w_fold, b_fold = _fold_bn(key, oc, ic, 1, 1)
    icp, ocp = _round_up(ic, _LANE), _round_up(oc, _LANE)
    wmat = jnp.zeros((icp, ocp), jnp.float32).at[:ic, :oc].set(w_fold[:, :, 0, 0].T)
    bias = jnp.zeros((ocp,), jnp.float32).at[:oc].set(b_fold)
    return {"wmat": wmat.astype(jnp.bfloat16), "bias": bias, "stride": stride}


def _convkxk_bn_init(key, oc, ic, kh, kw, stride):
    w_fold, b_fold = _fold_bn(key, oc, ic, kh, kw)
    icp, ocp = _round_up(ic, _LANE), _round_up(oc, _LANE)
    w_taps = jnp.transpose(w_fold, (2, 3, 1, 0)).reshape(kh * kw, ic, oc)
    w = jnp.zeros((kh * kw, icp, ocp), jnp.float32).at[:, :ic, :oc].set(w_taps)
    bias = jnp.zeros((ocp,), jnp.float32).at[:oc].set(b_fold)
    return {"w": w.astype(jnp.bfloat16), "bias": bias,
            "kh": kh, "kw": kw, "stride": stride}


def _conv1_im2col_init(key, oc=64, ic=3, k=7):
    """conv1 weight as an im2col matmul: (k*k*ic -> oc), lane-padded."""
    w_fold, b_fold = _fold_bn(key, oc, ic, k, k)
    kdim = k * k * ic
    kp, ocp = _round_up(kdim, _LANE), _round_up(oc, _LANE)
    wmat = jnp.transpose(w_fold, (2, 3, 1, 0)).reshape(kdim, oc)   # (ki,kj,c) x oc
    wmat = jnp.zeros((kp, ocp), jnp.float32).at[:kdim, :oc].set(wmat)
    bias = jnp.zeros((ocp,), jnp.float32).at[:oc].set(b_fold)
    return {"wmat": wmat.astype(jnp.bfloat16), "bias": bias,
            "k": k, "stride": 2, "pad": 3}


def _bottleneck_init(key, in_c, width, stride):
    ks = jax.random.split(key, 4)
    out_c = width * 4
    p = {"conv1": _conv1x1_bn_init(ks[0], width, in_c, 1),
         "conv2": _convkxk_bn_init(ks[1], width, width, 3, 3, stride),
         "conv3": _conv1x1_bn_init(ks[2], out_c, width, 1),
         "downsample": None}
    if stride != 1 or in_c != out_c:
        p["downsample"] = _conv1x1_bn_init(ks[3], out_c, in_c, stride)
    return p, out_c


def init_face_resnet(key, num_classes=10):
    del num_classes  # only consumed by the undefined `self.head`
    keys = jax.random.split(key, 3)
    params = {"conv1": _conv1_im2col_init(keys[0], 64, 3, 7)}
    layer_cfg = [(64, 3, 1), (128, 4, 2), (256, 6, 2), (512, 3, 2)]   # ResNet-50
    blk_keys = jax.random.split(keys[1], sum(n for _, n, _ in layer_cfg))
    layers, in_c, bi = [], 64, 0
    for width, nblocks, stride in layer_cfg:
        blocks = []
        for j in range(nblocks):
            bp, in_c = _bottleneck_init(blk_keys[bi], in_c, width,
                                        stride if j == 0 else 1)
            blocks.append(bp)
            bi += 1
        layers.append(blocks)
    params["layers"] = layers
    kfc_w, kfc_b, kcos = jax.random.split(keys[2], 3)
    params["fc_w"] = jax.random.normal(kfc_w, (2048, 512), jnp.float32) / np.sqrt(2048)
    params["fc_b"] = 0.01 * jax.random.normal(kfc_b, (512,), jnp.float32)
    params["cos_w"] = jax.random.normal(kcos, (512, 1), jnp.float32) / np.sqrt(512)
    return params


# ----------------------------------------------------------------------------
# Forward pass
# ----------------------------------------------------------------------------
def conv1_im2col_bn_relu(p, x):
    """7x7/s2 conv (+folded BN, ReLU) as im2col + matmul; K=147 padded to 256
    lanes at concat time, so conv1 does its real FLOPs (no 3->128 channel pad)."""
    B, H, W, C = x.shape
    k, s, pad = p["k"], p["stride"], p["pad"]
    oh = (H + 2 * pad - k) // s + 1
    ow = (W + 2 * pad - k) // s + 1
    xp = jnp.pad(x, ((0, 0), (pad, pad), (pad, pad), (0, 0)))
    cols = []
    for ki in range(k):
        for kj in range(k):
            cols.append(xp[:, ki:ki + (oh - 1) * s + 1:s,
                           kj:kj + (ow - 1) * s + 1:s, :])
    kp = p["wmat"].shape[0]
    cols.append(jnp.zeros((B, oh, ow, kp - k * k * C), x.dtype))     # lane pad
    a = jnp.concatenate(cols, axis=-1).reshape(B * oh * ow, kp)
    out = pallas_matmul_fused(a, p["wmat"], p["bias"], relu=True)
    return out.reshape(B, oh, ow, -1)


def conv1x1_bn(p, x, relu, residual=None):
    B, H, W, C = x.shape
    s = p["stride"]
    if s > 1:
        x = x[:, ::s, ::s, :]          # 1x1 stride-s conv = spatial subsample
        B, H, W, C = x.shape
    a = x.reshape(B * H * W, C)
    res = residual.reshape(B * H * W, -1) if residual is not None else None
    out = pallas_matmul_fused(a, p["wmat"], p["bias"], residual=res, relu=relu)
    return out.reshape(B, H, W, -1)


def bottleneck_apply(p, x):
    identity = x
    out = conv1x1_bn(p["conv1"], x, relu=True)
    out = direct_conv_bn_relu(p["conv2"], out)
    if p["downsample"] is not None:
        identity = conv1x1_bn(p["downsample"], x, relu=False)
    # residual add + ReLU fused into conv3's matmul epilogue
    out = conv1x1_bn(p["conv3"], out, relu=True, residual=identity)
    return out


def resnet50_backbone(params, x_nchw):
    x = jnp.transpose(x_nchw, (0, 2, 3, 1)).astype(jnp.bfloat16)  # NCHW -> NHWC
    x = conv1_im2col_bn_relu(params["conv1"], x)                  # 7x7 / s2
    x = maxpool_3x3_s2(x)
    for blocks in params["layers"]:
        for bp in blocks:
            x = bottleneck_apply(bp, x)
    B, H, W, C = x.shape
    # AdaptiveAvgPool2d(1) + fc(2048 -> 512) fused in one batch-tiled kernel
    emb = pallas_pool_fc(x.reshape(B, H * W, C), params["fc_w"], params["fc_b"])
    return emb                                                    # (B, 512) f32


def get_embed(params, x_nchw):
    emb = resnet50_backbone(params, x_nchw)
    features, norms, _ = pallas_embed_head(emb, params["cos_w"])
    return norms, features


def face_resnet_forward(params, x_nchw, labels):
    # TODO(synk): `self.head` (CenterLoss / Normal / margin head) is never
    # defined in FaceResNet.__init__, so logits come from the in-module
    # cosine_layer instead.
    del labels  # labels only feed the undefined head
    emb = resnet50_backbone(params, x_nchw)
    features, norms, logits = pallas_embed_head(emb, params["cos_w"])
    del norms
    return features, logits


if __name__ == "__main__":
    key = jax.random.PRNGKey(0)
    kp, kx, kl = jax.random.split(key, 3)
    params = init_face_resnet(kp, num_classes=10)
    # small, forward-consistent input: batch=2, 3-channel 32x32 image (NCHW)
    x = jax.random.normal(kx, (2, 3, 32, 32), jnp.float32)
    labels = jax.random.randint(kl, (2,), 0, 10)

    features, logits = face_resnet_forward(params, x, labels)
    jax.block_until_ready((features, logits))

    assert features.shape == (2, 512) and logits.shape == (2, 1)
    assert bool(jnp.all(jnp.isfinite(features))) and bool(jnp.all(jnp.isfinite(logits)))
    # features are L2-normalized rows (normalization done in f32 inside the head)
    assert bool(jnp.allclose(jnp.linalg.norm(features, axis=1), 1.0, atol=1e-3))
    print("KERNEL_OK")
</pallas_src>

<mosaic_0001>
module attributes {stable_mosaic.version = 11 : i64} {
  func.func @_mm1_kernel(%arg0: i32, %arg1: memref<256x256xbf16, #tpu.memory_space<vmem>>, %arg2: memref<256x128xbf16, #tpu.memory_space<vmem>>, %arg3: memref<1x128xf32, #tpu.memory_space<vmem>>, %arg4: memref<256x128xbf16, #tpu.memory_space<vmem>>) attributes {dimension_semantics = [#tpu.dimension_semantics<parallel>], iteration_bounds = array<i64: 2>, scalar_prefetch = 0 : i64, scratch_operands = 0 : i64, tpu.core_type = #tpu.core_type<tc>, window_params = [{transform_indices = @transform_0, window_bounds = array<i64: 256, 256>}, {pipeline_mode = #tpu.pipeline_mode<synchronous>, transform_indices = @transform_1, window_bounds = array<i64: 256, 128>}, {pipeline_mode = #tpu.pipeline_mode<synchronous>, transform_indices = @transform_2, window_bounds = array<i64: 1, 128>}, {transform_indices = @transform_3, window_bounds = array<i64: 256, 128>}]} {
    %c0 = arith.constant 0 : index
    %c0_0 = arith.constant 0 : index
    %0 = vector.load %arg1[%c0, %c0_0] : memref<256x256xbf16, #tpu.memory_space<vmem>>, vector<256x256xbf16>
    %c0_1 = arith.constant 0 : index
    %c0_2 = arith.constant 0 : index
    %1 = vector.load %arg2[%c0_1, %c0_2] : memref<256x128xbf16, #tpu.memory_space<vmem>>, vector<256x128xbf16>
    %cst = arith.constant dense<0.000000e+00> : vector<256x128xf32>
    %2 = tpu.matmul %0, %1, %cst {dimension_numbers = #tpu.dot_dimension_numbers<[1], [0], [0], [1], [0, 0, 1, 1], [], []>} : vector<256x256xbf16>, vector<256x128xbf16>, vector<256x128xf32> -> vector<256x128xf32>
    %c0_3 = arith.constant 0 : index
    %c0_4 = arith.constant 0 : index
    %3 = vector.load %arg3[%c0_3, %c0_4] : memref<1x128xf32, #tpu.memory_space<vmem>>, vector<1x128xf32>
    %4 = vector.broadcast %3 : vector<1x128xf32> to vector<256x128xf32>
    %5 = arith.addf %2, %4 : vector<256x128xf32>
    %cst_5 = arith.constant 0.000000e+00 : f32
    %6 = vector.broadcast %cst_5 : f32 to vector<256x128xf32>
    %7 = arith.maximumf %5, %6 : vector<256x128xf32>
    %8 = arith.truncf %7 : vector<256x128xf32> to vector<256x128xbf16>
    %c0_6 = arith.constant 0 : index
    %c0_7 = arith.constant 0 : index
    %9 = vector.load %arg4[%c0_6, %c0_7] : memref<256x128xbf16, #tpu.memory_space<vmem>>, vector<256x128xbf16>
    tpu.vector_store %arg4[%c0_6, %c0_7], %8 {strides = array<i32>} : memref<256x128xbf16, #tpu.memory_space<vmem>>, vector<256x128xbf16>,
    return
  }
  func.func @transform_0(%arg0: i32) -> (i32, i32) {
    %c0_i32 = arith.constant 0 : i32
    %c0_i32_0 = arith.constant 0 : i32
    return %arg0, %c0_i32 : i32, i32
  }
  func.func @transform_1(%arg0: i32) -> (i32, i32) {
    %c0_i32 = arith.constant 0 : i32
    %c0_i32_0 = arith.constant 0 : i32
    %c0_i32_1 = arith.constant 0 : i32
    return %c0_i32, %c0_i32_0 : i32, i32
  }
  func.func @transform_2(%arg0: i32) -> (i32, i32) {
    %c0_i32 = arith.constant 0 : i32
    %c0_i32_0 = arith.constant 0 : i32
    %c0_i32_1 = arith.constant 0 : i32
    return %c0_i32, %c0_i32_0 : i32, i32
  }
  func.func @transform_3(%arg0: i32) -> (i32, i32) {
    %c0_i32 = arith.constant 0 : i32
    %c0_i32_0 = arith.constant 0 : i32
    return %arg0, %c0_i32 : i32, i32
  }
}

</mosaic_0001>

<llo_original>
// kernel: tpu_custom_call.1
$region0: #{tpu_custom_call.1}
  #allocation0 [shape = 'u32[]', space=smem, size = 0x4, offset = 0x4, fixed_abs, tag = 'smem constant byte address 0x4 - core index']
  #allocation1 [shape = 'u32[144,128]{1,0:T(1,128)}', space=vmem, size = 0x12000, scoped, tag = 'internal scratch']
  %s0 = inlined_call_operand.hbm [shape: bf16[512,256], index: 0, kind: input, shape index: {}]
  %s1 = inlined_call_operand.hbm [shape: bf16[256,128], index: 1, kind: input, shape index: {}]
  %s2 = inlined_call_operand.vmem [shape: f32[1,128], index: 2, kind: input, shape index: {}]
  %s3 = inlined_call_operand.hbm [shape: bf16[512,128], index: 3, kind: output, shape index: {}]
  %s4 = sld [smem:[#allocation0]]
  $region53: #{tpu_custom_call.1} parent=0
    _
  %s6 = ssub.s32 1, %s4
  %s7 = scalar_select 0, %s6, %s4
  $region1: #{tpu_custom_call.1} parent=0
    #allocation2 [shape = 'u8[262144]{0}', space=vmem, size = 0x40000, scoped, tag = 'input window, operand 0']
    #allocation3 [shape = 's32[2]{0}', space=sflag, size = 0x8, scoped, tag = 'scoped memory for tpu_custom_call.1']
    #allocation4 [shape = 's32[2]{0}', space=sflag, size = 0x8, scoped, tag = 'scoped memory for tpu_custom_call.1']
    #allocation5 [shape = 'u8[65536]{0}', space=vmem, size = 0x10000, scoped, tag = 'input window, operand 1, single buffered']
    #allocation6 [shape = 's32[1]{0}', space=sflag, size = 0x4, scoped, tag = 'scoped memory for tpu_custom_call.1']
    #allocation7 [shape = 'u8[131072]{0}', space=vmem, size = 0x20000, scoped, tag = 'output window, operand 0']
    %8 = vsyncpa [#allocation3], 0
    %s9 = scalar_lea.sflag [#allocation3], 1
    %10 = vsyncpa %s9, 0
    %11 = vsyncpa [#allocation6], 0
    %12 = vsyncpa [#allocation4], 0
    %s13 = scalar_lea.sflag [#allocation4], 1
    %14 = vsyncpa %s13, 0
    loop: start=0, step=1, limit=4
    $region2: #{tpu_custom_call.1} parent=1 // loop_pre_header
      _
    $region3: #{tpu_custom_call.1} parent=1 // loop_header
      %s16 = sphi 0, %s20
      %p17 = scmp.ge.s32.totalorder %s16, 4
      %s26 = sphi 0, %s28
      %s29 = sphi 0, %s26
      %s30 = sphi 0, %s29
      %s46 = sphi 0, %s30
      %s50 = sphi 0, %s50
      %s52 = sphi 0, %s50
      %s53 = sphi 0, %s52
      %s67 = sphi 0, %s53
      %s71 = sphi 0, %s71
      %s73 = sphi 0, %s71
      %s74 = sphi 0, %s73
      %s88 = sphi 0, %s74
      %s94 = sphi 0, %s96
      %s97 = sphi 0, %s94
      %s98 = sphi 0, %s97
      %s114 = sphi 0, %s98
    $region4: #{tpu_custom_call.1} parent=1 // loop_header_branch
      %19 = sbr.rel (%p17) target = $region8
    $region5: #{tpu_custom_call.1} parent=1 // loop_body
      %s21 = ssub.s32 %s16, 1
      %s22 = ssub.s32 %s16, 2
      %s23 = sadd.s32 %s16, 1
      %s24 = ssub.s32 %s16, %s23
      %p25 = scmp.eq.s32.totalorder %s24, 0
      %s27 = sadd.s32 %s26, 1
      %s28 = scalar_select %p25, %s26, %s27
      %p31 = pneg %p25
      %p32 = scmp.eq.s32.totalorder %s16, 1
      %p33 = por %p31, %p32
      %p34 = scmp.ne.s32.totalorder %s26, %s29
      %p35 = scmp.eq.s32.totalorder %s16, 0
      %p36 = por %p34, %p35
      %p37 = scmp.ne.s32.totalorder %s26, %s29
      %p38 = scmp.eq.s32.totalorder %s21, 1
      %p39 = por %p37, %p38
      %p40 = scmp.ne.s32.totalorder %s29, %s30
      %p41 = scmp.eq.s32.totalorder %s21, 0
      %p42 = por %p40, %p41
      %p43 = scmp.ne.s32.totalorder %s29, %s30
      %p44 = scmp.eq.s32.totalorder %s22, 1
      %p45 = por %p43, %p44
      %p47 = scmp.ne.s32.totalorder %s30, %s46
      %p48 = scmp.eq.s32.totalorder %s22, 0
      %p49 = por %p47, %p48
      %s51 = sadd.s32 %s50, 1
      %p54 = scmp.eq.s32.totalorder %s16, 1
      %p55 = scmp.ne.s32.totalorder %s50, %s52
      %p56 = scmp.eq.s32.totalorder %s16, 0
      %p57 = por %p55, %p56
      %p58 = scmp.ne.s32.totalorder %s50, %s52
      %p59 = scmp.eq.s32.totalorder %s21, 1
      %p60 = por %p58, %p59
      %p61 = scmp.ne.s32.totalorder %s52, %s53
      %p62 = scmp.eq.s32.totalorder %s21, 0
      %p63 = por %p61, %p62
      %p64 = scmp.ne.s32.totalorder %s52, %s53
      %p65 = scmp.eq.s32.totalorder %s22, 1
      %p66 = por %p64, %p65
      %p68 = scmp.ne.s32.totalorder %s53, %s67
      %p69 = scmp.eq.s32.totalorder %s22, 0
      %p70 = por %p68, %p69
      %s72 = sadd.s32 %s71, 1
      %p75 = scmp.eq.s32.totalorder %s16, 1
      %p76 = scmp.ne.s32.totalorder %s71, %s73
      %p77 = scmp.eq.s32.totalorder %s16, 0
      %p78 = por %p76, %p77
      %p79 = scmp.ne.s32.totalorder %s71, %s73
      %p80 = scmp.eq.s32.totalorder %s21, 1
      %p81 = por %p79, %p80
      %p82 = scmp.ne.s32.totalorder %s73, %s74
      %p83 = scmp.eq.s32.totalorder %s21, 0
      %p84 = por %p82, %p83
      %p85 = scmp.ne.s32.totalorder %s73, %s74
      %p86 = scmp.eq.s32.totalorder %s22, 1
      %p87 = por %p85, %p86
      %p89 = scmp.ne.s32.totalorder %s74, %s88
      %p90 = scmp.eq.s32.totalorder %s22, 0
      %p91 = por %p89, %p90
      %s92 = ssub.s32 %s16, %s23
      %p93 = scmp.eq.s32.totalorder %s92, 0
      %s95 = sadd.s32 %s94, 1
      %s96 = scalar_select %p93, %s94, %s95
      %p99 = pneg %p93
      %p100 = scmp.eq.s32.totalorder %s16, 1
      %p101 = por %p99, %p100
      %p102 = scmp.ne.s32.totalorder %s94, %s97
      %p103 = scmp.eq.s32.totalorder %s16, 0
      %p104 = por %p102, %p103
      %p105 = scmp.ne.s32.totalorder %s94, %s97
      %p106 = scmp.eq.s32.totalorder %s21, 1
      %p107 = por %p105, %p106
      %p108 = scmp.ne.s32.totalorder %s97, %s98
      %p109 = scmp.eq.s32.totalorder %s21, 0
      %p110 = por %p108, %p109
      %p111 = scmp.ne.s32.totalorder %s97, %s98
      %p112 = scmp.eq.s32.totalorder %s22, 1
      %p113 = por %p111, %p112
      %p115 = scmp.ne.s32.totalorder %s98, %s114
      %p116 = scmp.eq.s32.totalorder %s22, 0
      %p117 = por %p115, %p116
      %p118 = scmp.le.s32.totalorder 1, %s16
      %p119 = scmp.lt.s32.totalorder %s16, 3
      %p120 = pnand %p118, %p119
      %p121 = pneg %p120
      // Predicated region
      $region9: #{tpu_custom_call.1} parent=5 // pred_check
        _
      $region10: #{tpu_custom_call.1} parent=5 // pred_check_branch
        %123 = sbr.rel (%p120) target = $region12
      $region11: #{tpu_custom_call.1} parent=5 // pred_region
        %s124 = ssub.s32 %s16, 1
        // Predicated region
        $region13: #{tpu_custom_call.1} parent=11 // pred_check
          %p125 = pneg %p63
        $region14: #{tpu_custom_call.1} parent=11 // pred_check_branch
          %127 = sbr.rel (%p125) target = $region16
        $region15: #{tpu_custom_call.1} parent=11 // pred_region
          %s129 = ssub.s32 2048, 2048
          %130 = vsyncadd [#allocation6], %s129
          %s131 = sshll.u32 [#allocation5], 4
          %s132 = int_to_ptr.vmem [resolvable:$true] %s131
          %137 = dma.hbm_to_vmem [thread:$0]  %s1, 2048, %s132, [#allocation6], 64, 64, 4
        $region16: #{tpu_custom_call.1} parent=11 // pred_fallthru
          _
        // Predicated region
        $region17: #{tpu_custom_call.1} parent=11 // pred_check
          %p138 = pneg %p84
        $region18: #{tpu_custom_call.1} parent=11 // pred_check_branch
          %140 = sbr.rel (%p138) target = $region20
        $region19: #{tpu_custom_call.1} parent=11 // pred_region
          _
        $region20: #{tpu_custom_call.1} parent=11 // pred_fallthru
          _
      $region12: #{tpu_custom_call.1} parent=5 // pred_fallthru
        _
      %p141 = scmp.lt.s32.totalorder %s16, 2
      // Predicated region
      $region21: #{tpu_custom_call.1} parent=5 // pred_check
        %p142 = pneg %p141
      $region22: #{tpu_custom_call.1} parent=5 // pred_check_branch
        %144 = sbr.rel (%p142) target = $region24
      $region23: #{tpu_custom_call.1} parent=5 // pred_region
        // Predicated region
        $region25: #{tpu_custom_call.1} parent=23 // pred_check
          %p145 = pneg %p36
        $region26: #{tpu_custom_call.1} parent=23 // pred_check_branch
          %147 = sbr.rel (%p145) target = $region28
        $region27: #{tpu_custom_call.1} parent=23 // pred_region
          %s148 = sand.u32 %s26, 1
          %s149 = scalar_lea.sflag [#allocation3], %s148
          %s150 = sand.u32 %s26, 1
          %s151 = smul.addr %s150, 256
          %s152 = scalar_lea.vmem [#allocation2], %s151
          %s153 = smul.u32 32, %s16
          %s155 = ssub.s32 4096, 4096
          %156 = vsyncadd %s149, %s155
          %s157 = smul.addr %s153, 2
          %s158 = smul.addr %s157, 64
          %s159 = scalar_lea.hbm %s0, %s158
          %s160 = sshll.u32 %s152, 4
          %s161 = int_to_ptr.vmem [resolvable:$true] %s160
          %166 = dma.hbm_to_vmem [thread:$0]  %s159, 4096, %s161, %s149, 128, 128, 8
        $region28: #{tpu_custom_call.1} parent=23 // pred_fallthru
          _
      $region24: #{tpu_custom_call.1} parent=5 // pred_fallthru
        _
      %p167 = scmp.le.s32.totalorder 1, %s16
      %p168 = scmp.lt.s32.totalorder %s16, 3
      %p169 = pnand %p167, %p168
      %p170 = pneg %p169
      // Predicated region
      $region29: #{tpu_custom_call.1} parent=5 // pred_check
        _
      $region30: #{tpu_custom_call.1} parent=5 // pred_check_branch
        %172 = sbr.rel (%p169) target = $region32
      $region31: #{tpu_custom_call.1} parent=5 // pred_region
        %s173 = ssub.s32 %s16, 1
        %s174 = sand.u32 %s29, 1
        %s175 = scalar_lea.sflag [#allocation3], %s174
        %s176 = sand.u32 %s29, 1
        %s177 = smul.addr %s176, 256
        %s178 = scalar_lea.vmem [#allocation2], %s177
        // Predicated region
        $region33: #{tpu_custom_call.1} parent=31 // pred_check
          %p179 = pneg %p42
        $region34: #{tpu_custom_call.1} parent=31 // pred_check_branch
          %181 = sbr.rel (%p179) target = $region36
        $region35: #{tpu_custom_call.1} parent=31 // pred_region
          %182 = dma.done %s175, 4096
        $region36: #{tpu_custom_call.1} parent=31 // pred_fallthru
          _
        // Predicated region
        $region37: #{tpu_custom_call.1} parent=31 // pred_check
          %p183 = pneg %p63
        $region38: #{tpu_custom_call.1} parent=31 // pred_check_branch
          %185 = sbr.rel (%p183) target = $region40
        $region39: #{tpu_custom_call.1} parent=31 // pred_region
          %186 = dma.done [#allocation6], 2048
        $region40: #{tpu_custom_call.1} parent=31 // pred_fallthru
          _
        %s187 = sand.u32 %s29, 1
        %s188 = scalar_lea.sflag [#allocation3], %s187
        %s189 = sand.u32 %s29, 1
        %s190 = smul.addr %s189, 256
        %s191 = scalar_lea.vmem [#allocation2], %s190
        %p192 = pneg %p42
        %p193 = pneg %p39
        %p194 = pneg %p63
        %p195 = pneg %p60
        %p196 = pneg %p84
        %p197 = pneg %p81
        %p198 = pneg %p110
        %p199 = pneg %p107
        %s200 = sand.u32 %s97, 1
        %s201 = scalar_lea.sflag [#allocation4], %s200
        %s202 = sand.u32 %s97, 1
        %s203 = smul.addr %s202, 128
        %s204 = scalar_lea.vmem [#allocation7], %s203
        %s205 = smul.u32 32, %s21
        %s206 = smul.u32 32, %s21
        %v208 = vld [vmem:[%s178] sm:$0xff]
        %v209 = vld [vmem:[%s178 + $0x8] sm:$0xff]
        %v210 = vld [vmem:[%s178 + $0x10] sm:$0xff]
        %v211 = vld [vmem:[%s178 + $0x18] sm:$0xff]
        %v212 = vld [vmem:[%s178 + $0x20] sm:$0xff]
        %v213 = vld [vmem:[%s178 + $0x28] sm:$0xff]
        %v214 = vld [vmem:[%s178 + $0x30] sm:$0xff]
        %v215 = vld [vmem:[%s178 + $0x38] sm:$0xff]
        %v216 = vld [vmem:[%s178 + $0x40] sm:$0xff]
        %v217 = vld [vmem:[%s178 + $0x48] sm:$0xff]
        %v218 = vld [vmem:[%s178 + $0x50] sm:$0xff]
        %v219 = vld [vmem:[%s178 + $0x58] sm:$0xff]
        %v220 = vld [vmem:[%s178 + $0x60] sm:$0xff]
        %v221 = vld [vmem:[%s178 + $0x68] sm:$0xff]
        %v222 = vld [vmem:[%s178 + $0x70] sm:$0xff]
        %v223 = vld [vmem:[%s178 + $0x78] sm:$0xff]
        %v224 = vld [vmem:[%s178 + $0x80] sm:$0xff]
        %v225 = vld [vmem:[%s178 + $0x88] sm:$0xff]
        %v226 = vld [vmem:[%s178 + $0x90] sm:$0xff]
        %v227 = vld [vmem:[%s178 + $0x98] sm:$0xff]
        %v228 = vld [vmem:[%s178 + $0xa0] sm:$0xff]
        %v229 = vld [vmem:[%s178 + $0xa8] sm:$0xff]
        %v230 = vld [vmem:[%s178 + $0xb0] sm:$0xff]
        %v231 = vld [vmem:[%s178 + $0xb8] sm:$0xff]
        %v232 = vld [vmem:[%s178 + $0xc0] sm:$0xff]
        %v233 = vld [vmem:[%s178 + $0xc8] sm:$0xff]
        %v234 = vld [vmem:[%s178 + $0xd0] sm:$0xff]
        %v235 = vld [vmem:[%s178 + $0xd8] sm:$0xff]
        %v236 = vld [vmem:[%s178 + $0xe0] sm:$0xff]
        %v237 = vld [vmem:[%s178 + $0xe8] sm:$0xff]
        %v238 = vld [vmem:[%s178 + $0xf0] sm:$0xff]
        %v239 = vld [vmem:[%s178 + $0xf8] sm:$0xff]
        %v240 = vld [vmem:[#allocation5] sm:$0xf]
        %v241 = vld [vmem:[#allocation5 + $0x4] sm:$0xf]
        %v242 = vld [vmem:[#allocation5 + $0x8] sm:$0xf]
        %v243 = vld [vmem:[#allocation5 + $0xc] sm:$0xf]
        %v244 = vld [vmem:[#allocation5 + $0x10] sm:$0xf]
        %v245 = vld [vmem:[#allocation5 + $0x14] sm:$0xf]
        %v246 = vld [vmem:[#allocation5 + $0x18] sm:$0xf]
        %v247 = vld [vmem:[#allocation5 + $0x1c] sm:$0xf]
        %v248 = vld [vmem:[#allocation5 + $0x20] sm:$0xf]
        %v249 = vld [vmem:[#allocation5 + $0x24] sm:$0xf]
        %v250 = vld [vmem:[#allocation5 + $0x28] sm:$0xf]
        %v251 = vld [vmem:[#allocation5 + $0x2c] sm:$0xf]
        %v252 = vld [vmem:[#allocation5 + $0x30] sm:$0xf]
        %v253 = vld [vmem:[#allocation5 + $0x34] sm:$0xf]
        %v254 = vld [vmem:[#allocation5 + $0x38] sm:$0xf]
        %v255 = vld [vmem:[#allocation5 + $0x3c] sm:$0xf]
        %v256 = vld [vmem:[#allocation5 + $0x40] sm:$0xf]
        %v257 = vld [vmem:[#allocation5 + $0x44] sm:$0xf]
        %v258 = vld [vmem:[#allocation5 + $0x48] sm:$0xf]
        %v259 = vld [vmem:[#allocation5 + $0x4c] sm:$0xf]
        %v260 = vld [vmem:[#allocation5 + $0x50] sm:$0xf]
        %v261 = vld [vmem:[#allocation5 + $0x54] sm:$0xf]
        %v262 = vld [vmem:[#allocation5 + $0x58] sm:$0xf]
        %v263 = vld [vmem:[#allocation5 + $0x5c] sm:$0xf]
        %v264 = vld [vmem:[#allocation5 + $0x60] sm:$0xf]
        %v265 = vld [vmem:[#allocation5 + $0x64] sm:$0xf]
        %v266 = vld [vmem:[#allocation5 + $0x68] sm:$0xf]
        %v267 = vld [vmem:[#allocation5 + $0x6c] sm:$0xf]
        %v268 = vld [vmem:[#allocation5 + $0x70] sm:$0xf]
        %v269 = vld [vmem:[#allocation5 + $0x74] sm:$0xf]
        %v270 = vld [vmem:[#allocation5 + $0x78] sm:$0xf]
        %v271 = vld [vmem:[#allocation5 + $0x7c] sm:$0xf]
        %v272 = vld [vmem:[%s2] sm:$0x1]
        %v274 = vlaneseq
        %v275 = vshrl.u32 %v274, 7
        %v276 = vsub.s32 0, %v275
        %v277 = vrot.slane %v272, %v276
        %v311 = vunpack.c.l.b16 %v208
        %v312 = vunpack.c.h.b16 %v208
        %v313 = vunpack.c.l.b16 %v209
        %v314 = vunpack.c.h.b16 %v209
        %v315 = vunpack.c.l.b16 %v210
        %v316 = vunpack.c.h.b16 %v210
        %v317 = vunpack.c.l.b16 %v211
        %v318 = vunpack.c.h.b16 %v211
        %v319 = vunpack.c.l.b16 %v212
        %v320 = vunpack.c.h.b16 %v212
        %v321 = vunpack.c.l.b16 %v213
        %v322 = vunpack.c.h.b16 %v213
        %v323 = vunpack.c.l.b16 %v214
        %v324 = vunpack.c.h.b16 %v214
        %v325 = vunpack.c.l.b16 %v215
        %v326 = vunpack.c.h.b16 %v215
        %v327 = vunpack.c.l.b16 %v216
        %v328 = vunpack.c.h.b16 %v216
        %v329 = vunpack.c.l.b16 %v217
        %v330 = vunpack.c.h.b16 %v217
        %v331 = vunpack.c.l.b16 %v218
        %v332 = vunpack.c.h.b16 %v218
        %v333 = vunpack.c.l.b16 %v219
        %v334 = vunpack.c.h.b16 %v219
        %v335 = vunpack.c.l.b16 %v220
        %v336 = vunpack.c.h.b16 %v220
        %v337 = vunpack.c.l.b16 %v221
        %v338 = vunpack.c.h.b16 %v221
        %v339 = vunpack.c.l.b16 %v222
        %v340 = vunpack.c.h.b16 %v222
        %v341 = vunpack.c.l.b16 %v223
        %v342 = vunpack.c.h.b16 %v223
        %v343 = vunpack.c.l.b16 %v224
        %v344 = vunpack.c.h.b16 %v224
        %v345 = vunpack.c.l.b16 %v225
        %v346 = vunpack.c.h.b16 %v225
        %v347 = vunpack.c.l.b16 %v226
        %v348 = vunpack.c.h.b16 %v226
        %v349 = vunpack.c.l.b16 %v227
        %v350 = vunpack.c.h.b16 %v227
        %v351 = vunpack.c.l.b16 %v228
        %v352 = vunpack.c.h.b16 %v228
        %v353 = vunpack.c.l.b16 %v229
        %v354 = vunpack.c.h.b16 %v229
        %v355 = vunpack.c.l.b16 %v230
        %v356 = vunpack.c.h.b16 %v230
        %v357 = vunpack.c.l.b16 %v231
        %v358 = vunpack.c.h.b16 %v231
        %v359 = vunpack.c.l.b16 %v232
        %v360 = vunpack.c.h.b16 %v232
        %v361 = vunpack.c.l.b16 %v233
        %v362 = vunpack.c.h.b16 %v233
        %v363 = vunpack.c.l.b16 %v234
        %v364 = vunpack.c.h.b16 %v234
        %v365 = vunpack.c.l.b16 %v235
        %v366 = vunpack.c.h.b16 %v235
        %v367 = vunpack.c.l.b16 %v236
        %v368 = vunpack.c.h.b16 %v236
        %v369 = vunpack.c.l.b16 %v237
        %v370 = vunpack.c.h.b16 %v237
        %v371 = vunpack.c.l.b16 %v238
        %v372 = vunpack.c.h.b16 %v238
        %v373 = vunpack.c.l.b16 %v239
        %v374 = vunpack.c.h.b16 %v239
        %v375 = vpack.c.b16 %v313, %v311
        %v376 = vpack.c.b16 %v314, %v312
        %v377 = vpack.c.b16 %v317, %v315
        %v378 = vpack.c.b16 %v318, %v316
        %v379 = vpack.c.b16 %v321, %v319
        %v380 = vpack.c.b16 %v322, %v320
        %v381 = vpack.c.b16 %v325, %v323
        %v382 = vpack.c.b16 %v326, %v324
        %v383 = vpack.c.b16 %v329, %v327
        %v384 = vpack.c.b16 %v330, %v328
        %v385 = vpack.c.b16 %v333, %v331
        %v386 = vpack.c.b16 %v334, %v332
        %v387 = vpack.c.b16 %v337, %v335
        %v388 = vpack.c.b16 %v338, %v336
        %v389 = vpack.c.b16 %v341, %v339
        %v390 = vpack.c.b16 %v342, %v340
        %v391 = vpack.c.b16 %v345, %v343
        %v392 = vpack.c.b16 %v346, %v344
        %v393 = vpack.c.b16 %v349, %v347
        %v394 = vpack.c.b16 %v350, %v348
        %v395 = vpack.c.b16 %v353, %v351
        %v396 = vpack.c.b16 %v354, %v352
        %v397 = vpack.c.b16 %v357, %v355
        %v398 = vpack.c.b16 %v358, %v356
        %v399 = vpack.c.b16 %v361, %v359
        %v400 = vpack.c.b16 %v362, %v360
        %v401 = vpack.c.b16 %v365, %v363
        %v402 = vpack.c.b16 %v366, %v364
        %v403 = vpack.c.b16 %v369, %v367
        %v404 = vpack.c.b16 %v370, %v368
        %v405 = vpack.c.b16 %v373, %v371
        %v406 = vpack.c.b16 %v374, %v372
        %v471 = vunpack.c.l.b16 %v240
        %v472 = vunpack.c.l.b16 %v241
        %v473 = vunpack.c.l.b16 %v242
        %v474 = vunpack.c.l.b16 %v243
        %v475 = vunpack.c.l.b16 %v244
        %v476 = vunpack.c.l.b16 %v245
        %v477 = vunpack.c.l.b16 %v246
        %v478 = vunpack.c.l.b16 %v247
        %v479 = vunpack.c.l.b16 %v248
        %v480 = vunpack.c.l.b16 %v249
        %v481 = vunpack.c.l.b16 %v250
        %v482 = vunpack.c.l.b16 %v251
        %v483 = vunpack.c.l.b16 %v252
        %v484 = vunpack.c.l.b16 %v253
        %v485 = vunpack.c.l.b16 %v254
        %v486 = vunpack.c.l.b16 %v255
        %v487 = vunpack.c.l.b16 %v256
        %v488 = vunpack.c.l.b16 %v257
        %v489 = vunpack.c.l.b16 %v258
        %v490 = vunpack.c.l.b16 %v259
        %v491 = vunpack.c.l.b16 %v260
        %v492 = vunpack.c.l.b16 %v261
        %v493 = vunpack.c.l.b16 %v262
        %v494 = vunpack.c.l.b16 %v263
        %v495 = vunpack.c.l.b16 %v264
        %v496 = vunpack.c.l.b16 %v265
        %v497 = vunpack.c.l.b16 %v266
        %v498 = vunpack.c.l.b16 %v267
        %v499 = vunpack.c.l.b16 %v268
        %v500 = vunpack.c.l.b16 %v269
        %v501 = vunpack.c.l.b16 %v270
        %v502 = vunpack.c.l.b16 %v271
        %v503 = vpack.c.b16 %v472, %v471
        %v504 = vpack.c.b16 %v474, %v473
        %v505 = vpack.c.b16 %v476, %v475
        %v506 = vpack.c.b16 %v478, %v477
        %v507 = vpack.c.b16 %v480, %v479
        %v508 = vpack.c.b16 %v482, %v481
        %v509 = vpack.c.b16 %v484, %v483
        %v510 = vpack.c.b16 %v486, %v485
        %v511 = vpack.c.b16 %v488, %v487
        %v512 = vpack.c.b16 %v490, %v489
        %v513 = vpack.c.b16 %v492, %v491
        %v514 = vpack.c.b16 %v494, %v493
        %v515 = vpack.c.b16 %v496, %v495
        %v516 = vpack.c.b16 %v498, %v497
        %v517 = vpack.c.b16 %v500, %v499
        %v518 = vpack.c.b16 %v502, %v501
        %535 = vmatprep.subr.bf16.mxu0 0
        %536 = vmatpush1.bf16.msra.mxu0 %v503
        %537 = vmatprep.subr.bf16.mxu0 0
        %538 = vmatpush1.bf16.msra.mxu0 %v504
        %539 = vmatprep.subr.bf16.mxu0 0
        %540 = vmatpush1.bf16.msra.mxu0 %v505
        %541 = vmatprep.subr.bf16.mxu0 0
        %542 = vmatpush1.bf16.msra.mxu0 %v506
        %543 = vmatprep.subr.bf16.mxu0 0
        %544 = vmatpush1.bf16.msra.mxu0 %v507
        %545 = vmatprep.subr.bf16.mxu0 0
        %546 = vmatpush1.bf16.msra.mxu0 %v508
        %547 = vmatprep.subr.bf16.mxu0 0
        %548 = vmatpush1.bf16.msra.mxu0 %v509
        %549 = vmatprep.subr.bf16.mxu0 0
        %550 = vmatpush1.bf16.msra.mxu0 %v510
        %551 = vmatprep.subr.bf16.mxu0 0
        %552 = vmatpush1.bf16.msra.mxu0 %v511
        %553 = vmatprep.subr.bf16.mxu0 0
        %554 = vmatpush1.bf16.msra.mxu0 %v512
        %555 = vmatprep.subr.bf16.mxu0 0
        %556 = vmatpush1.bf16.msra.mxu0 %v513
        %557 = vmatprep.subr.bf16.mxu0 0
        %558 = vmatpush1.bf16.msra.mxu0 %v514
        %559 = vmatprep.subr.bf16.mxu0 0
        %560 = vmatpush1.bf16.msra.mxu0 %v515
        %561 = vmatprep.subr.bf16.mxu0 0
        %562 = vmatpush1.bf16.msra.mxu0 %v516
        %563 = vmatprep.subr.bf16.mxu0 0
        %564 = vmatpush1.bf16.msra.mxu0 %v517
        %565 = vmatprep.subr.bf16.mxu0 0
        %566 = vmatpush1.bf16.msra.mxu0 %v518
        %567 = vmatprep.mubr.bf16.mxu0 %v376
        %568 = vmatmul.mubr.bf16.gmra.mrb[0].mxu0 %v375
        %v569 = vpop.f32.mrb[0].mxu0
        %v570 = vadd.f32 %v277, %v569
        %v571 = vpop.f32.mrb[0].mxu0
        %v572 = vpop.f32.mrb[0].mxu0
        %v573 = vadd.f32 %v277, %v572
        %v574 = vpop.f32.mrb[0].mxu0
        %575 = vmatprep.mubr.bf16.mxu0 %v378
        %576 = vmatmul.mubr.bf16.gmra.mrb[0].mxu0 %v377
        %v577 = vpop.f32.mrb[0].mxu0
        %v578 = vadd.f32 %v277, %v577
        %v579 = vpop.f32.mrb[0].mxu0
        %v580 = vpop.f32.mrb[0].mxu0
        %v581 = vadd.f32 %v277, %v580
        %v582 = vpop.f32.mrb[0].mxu0
        %583 = vmatprep.mubr.bf16.mxu0 %v380
        %584 = vmatmul.mubr.bf16.gmra.mrb[0].mxu0 %v379
        %v585 = vpop.f32.mrb[0].mxu0
        %v586 = vadd.f32 %v277, %v585
        %v587 = vpop.f32.mrb[0].mxu0
        %v588 = vpop.f32.mrb[0].mxu0
        %v589 = vadd.f32 %v277, %v588
        %v590 = vpop.f32.mrb[0].mxu0
        %591 = vmatprep.mubr.bf16.mxu0 %v382
        %592 = vmatmul.mubr.bf16.gmra.mrb[0].mxu0 %v381
        %v593 = vpop.f32.mrb[0].mxu0
        %v594 = vadd.f32 %v277, %v593
        %v595 = vpop.f32.mrb[0].mxu0
        %v596 = vpop.f32.mrb[0].mxu0
        %v597 = vadd.f32 %v277, %v596
        %v598 = vpop.f32.mrb[0].mxu0
        %599 = vmatprep.mubr.bf16.mxu0 %v384
        %600 = vmatmul.mubr.bf16.gmra.mrb[0].mxu0 %v383
        %v601 = vpop.f32.mrb[0].mxu0
        %v602 = vadd.f32 %v277, %v601
        %v603 = vpop.f32.mrb[0].mxu0
        %v604 = vpop.f32.mrb[0].mxu0
        %v605 = vadd.f32 %v277, %v604
        %v606 = vpop.f32.mrb[0].mxu0
        %607 = vmatprep.mubr.bf16.mxu0 %v386
        %608 = vmatmul.mubr.bf16.gmra.mrb[0].mxu0 %v385
        %v609 = vpop.f32.mrb[0].mxu0
        %v610 = vadd.f32 %v277, %v609
        %v611 = vpop.f32.mrb[0].mxu0
        %v612 = vpop.f32.mrb[0].mxu0
        %v613 = vadd.f32 %v277, %v612
        %v614 = vpop.f32.mrb[0].mxu0
        %615 = vmatprep.mubr.bf16.mxu0 %v388
        %616 = vmatmul.mubr.bf16.gmra.mrb[0].mxu0 %v387
        %v617 = vpop.f32.mrb[0].mxu0
        %v618 = vadd.f32 %v277, %v617
        %v619 = vpop.f32.mrb[0].mxu0
        %v620 = vpop.f32.mrb[0].mxu0
        %v621 = vadd.f32 %v277, %v620
        %v622 = vpop.f32.mrb[0].mxu0
        %623 = vmatprep.mubr.bf16.mxu0 %v390
        %624 = vmatmul.mubr.bf16.gmra.mrb[0].mxu0 %v389
        %v625 = vpop.f32.mrb[0].mxu0
        %v626 = vadd.f32 %v277, %v625
        %v627 = vpop.f32.mrb[0].mxu0
        %v628 = vpop.f32.mrb[0].mxu0
        %v629 = vadd.f32 %v277, %v628
        %v630 = vpop.f32.mrb[0].mxu0
        %631 = vmatprep.mubr.bf16.mxu0 %v392
        %632 = vmatmul.mubr.bf16.gmra.mrb[0].mxu0 %v391
        %v633 = vpop.f32.mrb[0].mxu0
        %v634 = vadd.f32 %v277, %v633
        %v635 = vpop.f32.mrb[0].mxu0
        %v636 = vpop.f32.mrb[0].mxu0
        %v637 = vadd.f32 %v277, %v636
        %v638 = vpop.f32.mrb[0].mxu0
        %639 = vmatprep.mubr.bf16.mxu0 %v394
        %640 = vmatmul.mubr.bf16.gmra.mrb[0].mxu0 %v393
        %v641 = vpop.f32.mrb[0].mxu0
        %v642 = vadd.f32 %v277, %v641
        %v643 = vpop.f32.mrb[0].mxu0
        %v644 = vpop.f32.mrb[0].mxu0
        %v645 = vadd.f32 %v277, %v644
        %v646 = vpop.f32.mrb[0].mxu0
        %647 = vmatprep.mubr.bf16.mxu0 %v396
        %648 = vmatmul.mubr.bf16.gmra.mrb[0].mxu0 %v395
        %v649 = vpop.f32.mrb[0].mxu0
        %v650 = vadd.f32 %v277, %v649
        %v651 = vpop.f32.mrb[0].mxu0
        %v652 = vpop.f32.mrb[0].mxu0
        %v653 = vadd.f32 %v277, %v652
        %v654 = vpop.f32.mrb[0].mxu0
        %655 = vmatprep.mubr.bf16.mxu0 %v398
        %656 = vmatmul.mubr.bf16.gmra.mrb[0].mxu0 %v397
        %v657 = vpop.f32.mrb[0].mxu0
        %v658 = vadd.f32 %v277, %v657
        %v659 = vpop.f32.mrb[0].mxu0
        %v660 = vpop.f32.mrb[0].mxu0
        %v661 = vadd.f32 %v277, %v660
        %v662 = vpop.f32.mrb[0].mxu0
        %663 = vmatprep.mubr.bf16.mxu0 %v400
        %664 = vmatmul.mubr.bf16.gmra.mrb[0].mxu0 %v399
        %v665 = vpop.f32.mrb[0].mxu0
        %v666 = vadd.f32 %v277, %v665
        %v667 = vpop.f32.mrb[0].mxu0
        %v668 = vpop.f32.mrb[0].mxu0
        %v669 = vadd.f32 %v277, %v668
        %v670 = vpop.f32.mrb[0].mxu0
        %671 = vmatprep.mubr.bf16.mxu0 %v402
        %672 = vmatmul.mubr.bf16.gmra.mrb[0].mxu0 %v401
        %v673 = vpop.f32.mrb[0].mxu0
        %v674 = vadd.f32 %v277, %v673
        %v675 = vpop.f32.mrb[0].mxu0
        %v676 = vpop.f32.mrb[0].mxu0
        %v677 = vadd.f32 %v277, %v676
        %v678 = vpop.f32.mrb[0].mxu0
        %679 = vmatprep.mubr.bf16.mxu0 %v404
        %680 = vmatmul.mubr.bf16.gmra.mrb[0].mxu0 %v403
        %v681 = vpop.f32.mrb[0].mxu0
        %v682 = vadd.f32 %v277, %v681
        %v683 = vpop.f32.mrb[0].mxu0
        %v684 = vpop.f32.mrb[0].mxu0
        %v685 = vadd.f32 %v277, %v684
        %v686 = vpop.f32.mrb[0].mxu0
        %687 = vmatprep.mubr.bf16.mxu0 %v406
        %688 = vmatmul.mubr.bf16.gmra.mrb[0].mxu0 %v405
        %v689 = vpop.f32.mrb[0].mxu0
        %v690 = vadd.f32 %v277, %v689
        %v691 = vpop.f32.mrb[0].mxu0
        %v692 = vpop.f32.mrb[0].mxu0
        %v693 = vadd.f32 %v277, %v692
        %v694 = vpop.f32.mrb[0].mxu0
        %695 = vdwg.mxu0
        %v696 = vmax.f32 %v570, 0.0
        %v697 = vmax.f32 %v573, 0.0
        %v698 = vmax.f32 %v578, 0.0
        %v699 = vmax.f32 %v581, 0.0
        %v700 = vmax.f32 %v586, 0.0
        %v701 = vmax.f32 %v589, 0.0
        %v702 = vmax.f32 %v594, 0.0
        %v703 = vmax.f32 %v597, 0.0
        %v704 = vmax.f32 %v602, 0.0
        %v705 = vmax.f32 %v605, 0.0
        %v706 = vmax.f32 %v610, 0.0
        %v707 = vmax.f32 %v613, 0.0
        %v708 = vmax.f32 %v618, 0.0
        %v709 = vmax.f32 %v621, 0.0
        %v710 = vmax.f32 %v626, 0.0
        %v711 = vmax.f32 %v629, 0.0
        %v712 = vmax.f32 %v634, 0.0
        %v713 = vmax.f32 %v637, 0.0
        %v714 = vmax.f32 %v642, 0.0
        %v715 = vmax.f32 %v645, 0.0
        %v716 = vmax.f32 %v650, 0.0
        %v717 = vmax.f32 %v653, 0.0
        %v718 = vmax.f32 %v658, 0.0
        %v719 = vmax.f32 %v661, 0.0
        %v720 = vmax.f32 %v666, 0.0
        %v721 = vmax.f32 %v669, 0.0
        %v722 = vmax.f32 %v674, 0.0
        %v723 = vmax.f32 %v677, 0.0
        %v724 = vmax.f32 %v682, 0.0
        %v725 = vmax.f32 %v685, 0.0
        %v726 = vmax.f32 %v690, 0.0
        %v727 = vmax.f32 %v693, 0.0
        %v728 = vpack.c.bf16 %v697, %v696
        %v729 = vpack.c.bf16 %v699, %v698
        %v730 = vpack.c.bf16 %v701, %v700
        %v731 = vpack.c.bf16 %v703, %v702
        %v732 = vpack.c.bf16 %v705, %v704
        %v733 = vpack.c.bf16 %v707, %v706
        %v734 = vpack.c.bf16 %v709, %v708
        %v735 = vpack.c.bf16 %v711, %v710
        %v736 = vpack.c.bf16 %v713, %v712
        %v737 = vpack.c.bf16 %v715, %v714
        %v738 = vpack.c.bf16 %v717, %v716
        %v739 = vpack.c.bf16 %v719, %v718
        %v740 = vpack.c.bf16 %v721, %v720
        %v741 = vpack.c.bf16 %v723, %v722
        %v742 = vpack.c.bf16 %v725, %v724
        %v743 = vpack.c.bf16 %v727, %v726
        %v760 = vunpack.c.l.b16 %v728
        %v761 = vunpack.c.h.b16 %v728
        %v762 = vunpack.c.l.b16 %v729
        %v763 = vunpack.c.h.b16 %v729
        %v764 = vunpack.c.l.b16 %v730
        %v765 = vunpack.c.h.b16 %v730
        %v766 = vunpack.c.l.b16 %v731
        %v767 = vunpack.c.h.b16 %v731
        %v768 = vunpack.c.l.b16 %v732
        %v769 = vunpack.c.h.b16 %v732
        %v770 = vunpack.c.l.b16 %v733
        %v771 = vunpack.c.h.b16 %v733
        %v772 = vunpack.c.l.b16 %v734
        %v773 = vunpack.c.h.b16 %v734
        %v774 = vunpack.c.l.b16 %v735
        %v775 = vunpack.c.h.b16 %v735
        %v776 = vunpack.c.l.b16 %v736
        %v777 = vunpack.c.h.b16 %v736
        %v778 = vunpack.c.l.b16 %v737
        %v779 = vunpack.c.h.b16 %v737
        %v780 = vunpack.c.l.b16 %v738
        %v781 = vunpack.c.h.b16 %v738
        %v782 = vunpack.c.l.b16 %v739
        %v783 = vunpack.c.h.b16 %v739
        %v784 = vunpack.c.l.b16 %v740
        %v785 = vunpack.c.h.b16 %v740
        %v786 = vunpack.c.l.b16 %v741
        %v787 = vunpack.c.h.b16 %v741
        %v788 = vunpack.c.l.b16 %v742
        %v789 = vunpack.c.h.b16 %v742
        %v790 = vunpack.c.l.b16 %v743
        %v791 = vunpack.c.h.b16 %v743
        %v792 = vpack.c.b16 %v760, %v760
        %v793 = vpack.c.b16 %v761, %v761
        %v794 = vpack.c.b16 %v762, %v762
        %v795 = vpack.c.b16 %v763, %v763
        %v796 = vpack.c.b16 %v764, %v764
        %v797 = vpack.c.b16 %v765, %v765
        %v798 = vpack.c.b16 %v766, %v766
        %v799 = vpack.c.b16 %v767, %v767
        %v800 = vpack.c.b16 %v768, %v768
        %v801 = vpack.c.b16 %v769, %v769
        %v802 = vpack.c.b16 %v770, %v770
        %v803 = vpack.c.b16 %v771, %v771
        %v804 = vpack.c.b16 %v772, %v772
        %v805 = vpack.c.b16 %v773, %v773
        %v806 = vpack.c.b16 %v774, %v774
        %v807 = vpack.c.b16 %v775, %v775
        %v808 = vpack.c.b16 %v776, %v776
        %v809 = vpack.c.b16 %v777, %v777
        %v810 = vpack.c.b16 %v778, %v778
        %v811 = vpack.c.b16 %v779, %v779
        %v812 = vpack.c.b16 %v780, %v780
        %v813 = vpack.c.b16 %v781, %v781
        %v814 = vpack.c.b16 %v782, %v782
        %v815 = vpack.c.b16 %v783, %v783
        %v816 = vpack.c.b16 %v784, %v784
        %v817 = vpack.c.b16 %v785, %v785
        %v818 = vpack.c.b16 %v786, %v786
        %v819 = vpack.c.b16 %v787, %v787
        %v820 = vpack.c.b16 %v788, %v788
        %v821 = vpack.c.b16 %v789, %v789
        %v822 = vpack.c.b16 %v790, %v790
        %v823 = vpack.c.b16 %v791, %v791
        %856 = vst [vmem:[%s204] sm:$0xf] %v792
        %857 = vst [vmem:[%s204 + $0x4] sm:$0xf] %v793
        %858 = vst [vmem:[%s204 + $0x8] sm:$0xf] %v794
        %859 = vst [vmem:[%s204 + $0xc] sm:$0xf] %v795
        %860 = vst [vmem:[%s204 + $0x10] sm:$0xf] %v796
        %861 = vst [vmem:[%s204 + $0x14] sm:$0xf] %v797
        %862 = vst [vmem:[%s204 + $0x18] sm:$0xf] %v798
        %863 = vst [vmem:[%s204 + $0x1c] sm:$0xf] %v799
        %864 = vst [vmem:[%s204 + $0x20] sm:$0xf] %v800
        %865 = vst [vmem:[%s204 + $0x24] sm:$0xf] %v801
        %866 = vst [vmem:[%s204 + $0x28] sm:$0xf] %v802
        %867 = vst [vmem:[%s204 + $0x2c] sm:$0xf] %v803
        %868 = vst [vmem:[%s204 + $0x30] sm:$0xf] %v804
        %869 = vst [vmem:[%s204 + $0x34] sm:$0xf] %v805
        %870 = vst [vmem:[%s204 + $0x38] sm:$0xf] %v806
        %871 = vst [vmem:[%s204 + $0x3c] sm:$0xf] %v807
        %872 = vst [vmem:[%s204 + $0x40] sm:$0xf] %v808
        %873 = vst [vmem:[%s204 + $0x44] sm:$0xf] %v809
        %874 = vst [vmem:[%s204 + $0x48] sm:$0xf] %v810
        %875 = vst [vmem:[%s204 + $0x4c] sm:$0xf] %v811
        %876 = vst [vmem:[%s204 + $0x50] sm:$0xf] %v812
        %877 = vst [vmem:[%s204 + $0x54] sm:$0xf] %v813
        %878 = vst [vmem:[%s204 + $0x58] sm:$0xf] %v814
        %879 = vst [vmem:[%s204 + $0x5c] sm:$0xf] %v815
        %880 = vst [vmem:[%s204 + $0x60] sm:$0xf] %v816
        %881 = vst [vmem:[%s204 + $0x64] sm:$0xf] %v817
        %882 = vst [vmem:[%s204 + $0x68] sm:$0xf] %v818
        %883 = vst [vmem:[%s204 + $0x6c] sm:$0xf] %v819
        %884 = vst [vmem:[%s204 + $0x70] sm:$0xf] %v820
        %885 = vst [vmem:[%s204 + $0x74] sm:$0xf] %v821
        %886 = vst [vmem:[%s204 + $0x78] sm:$0xf] %v822
        %887 = vst [vmem:[%s204 + $0x7c] sm:$0xf] %v823
        %s888 = sand.u32 %s97, 1
        %s889 = scalar_lea.sflag [#allocation4], %s888
        %s890 = sand.u32 %s97, 1
        %s891 = smul.addr %s890, 128
        %s892 = scalar_lea.vmem [#allocation7], %s891
        // Predicated region
        $region41: #{tpu_custom_call.1} parent=31 // pred_check
          %p893 = pneg %p107
        $region42: #{tpu_custom_call.1} parent=31 // pred_check_branch
          %895 = sbr.rel (%p893) target = $region44
        $region43: #{tpu_custom_call.1} parent=31 // pred_region
          %s896 = smul.u32 32, %s21
          %s898 = ssub.s32 2048, 2048
          %899 = vsyncadd %s889, %s898
          %s900 = smul.addr %s896, 64
          %s901 = scalar_lea.hbm %s3, %s900
          %s902 = sshll.u32 %s892, 4
          %s903 = int_to_ptr.vmem [resolvable:$true] %s902
          %908 = dma.vmem_to_hbm [thread:$0]  %s903, 2048, %s901, %s889, 64, 64, 4
        $region44: #{tpu_custom_call.1} parent=31 // pred_fallthru
          _
      $region32: #{tpu_custom_call.1} parent=5 // pred_fallthru
        _
      %p909 = scmp.le.s32.totalorder 2, %s16
      // Predicated region
      $region45: #{tpu_custom_call.1} parent=5 // pred_check
        %p910 = pneg %p909
      $region46: #{tpu_custom_call.1} parent=5 // pred_check_branch
        %912 = sbr.rel (%p910) target = $region48
      $region47: #{tpu_custom_call.1} parent=5 // pred_region
        %s913 = ssub.s32 %s16, 2
        // Predicated region
        $region49: #{tpu_custom_call.1} parent=47 // pred_check
          %p914 = pneg %p113
        $region50: #{tpu_custom_call.1} parent=47 // pred_check_branch
          %916 = sbr.rel (%p914) target = $region52
        $region51: #{tpu_custom_call.1} parent=47 // pred_region
          %s917 = sand.u32 %s98, 1
          %s918 = scalar_lea.sflag [#allocation4], %s917
          %s919 = sand.u32 %s98, 1
          %s920 = smul.addr %s919, 128
          %s921 = scalar_lea.vmem [#allocation7], %s920
          %922 = dma.done %s918, 2048
        $region52: #{tpu_custom_call.1} parent=47 // pred_fallthru
          _
      $region48: #{tpu_custom_call.1} parent=5 // pred_fallthru
        _
    $region6: #{tpu_custom_call.1} parent=1 // loop_footer
      %s20 = sadd.s32 1, %s16
    $region7: #{tpu_custom_call.1} parent=1 // loop_footer_branch
      %15 = sbr.rel target = $region3
    $region8: #{tpu_custom_call.1} parent=1 // loop_exit
      _
    %923 = vsyncpa [#allocation3], 1
    %s924 = scalar_lea.sflag [#allocation3], 1
    %925 = vsyncpa %s924, 1
    %926 = vsyncpa [#allocation6], 1
    %927 = vsyncpa [#allocation4], 1
    %s928 = scalar_lea.sflag [#allocation4], 1
    %929 = vsyncpa %s928, 1

</llo_original>
